<compile_context>
chip_gen: v5e
topology: v5e:2x2
jax: 0.10.0
libtpu: 0.0.40
codegen_flags: <defaults>
</compile_context>

<pallas_src>
import functools

import jax
import jax.numpy as jnp
from jax.experimental import pallas as pl
from jax.experimental.pallas import tpu as pltpu

_LANE = 128            # lane width (last dim of every block)
_MAX_BLOCK_ROWS = 4096  # (4096, 128) f32 = 2 MiB per pipeline buffer


def _lsgan_kernel(*refs, targets, block_rows, rows, needs_mask):
    """Each grid step writes a (1, 128) lane-vector of partial SSE sums
    covering this step's row block, summed over all fused inputs."""
    num_in = len(targets)
    x_refs = refs[:num_in]
    out_ref = refs[num_in]

    def partial_sse(mask):
        total = jnp.zeros((1, _LANE), jnp.float32)
        for x_ref, t in zip(x_refs, targets):
            x = x_ref[...]
            if x.dtype != jnp.float32:
                x = x.astype(jnp.float32)
            d = x - jnp.float32(t)
            sq = d * d
            if mask is not None:
                sq = jnp.where(mask, sq, 0.0)
            total = total + jnp.sum(sq, axis=0, keepdims=True)
        return total

    if not needs_mask:
        # Exactly-divisible case: no mask work on any step.
        out_ref[...] = partial_sse(None)
    else:
        i = pl.program_id(0)
        last = pl.num_programs(0) - 1

        @pl.when(i < last)
        def _fast():
            out_ref[...] = partial_sse(None)

        @pl.when(i == last)
        def _tail():
            # Only the final (partial) block pays for the row mask; garbage
            # rows DMA'd past the array end are select-ed away (select does
            # not propagate NaN/Inf from the unselected operand).
            row = (jax.lax.broadcasted_iota(jnp.int32, (block_rows, _LANE), 0)
                   + i * block_rows)
            out_ref[...] = partial_sse(row < rows)


def _sublane_pack(dtype):
    itemsize = jnp.dtype(dtype).itemsize
    return max(8, 8 * (4 // itemsize))   # f32 -> 8, bf16 -> 16, int8/fp8 -> 32


def _as_lane_matrix(x, target):
    """Flatten to a lane-dense (rows, 128) matrix.  Free (bitcast) reshape
    when the element count divides 128; otherwise only the <128-element tail
    is padded, using the target value so the pad contributes exactly zero."""
    xf = x.reshape(-1)
    n = xf.shape[0]
    rem = n % _LANE
    if rem:
        # TODO(synk): very large non-128-divisible inputs still pay one pad
        # copy here; the patch-GAN outputs that hit this path are tiny.
        xf = jnp.pad(xf, (0, _LANE - rem), constant_values=float(target))
    return xf.reshape(-1, _LANE)


def _lsgan_mean(xs, targets):
    """sum_over_inputs( mean((x - t)^2) ) for inputs of identical element
    count, computed with one fused streaming Pallas reduction."""
    n = int(xs[0].size)
    mats = [_as_lane_matrix(x, t) for x, t in zip(xs, targets)]
    rows = mats[0].shape[0]

    pack = max(_sublane_pack(m.dtype) for m in mats)
    if rows <= _MAX_BLOCK_ROWS:
        block_rows = rows                       # single full-extent block
    else:
        nblocks = -(-rows // _MAX_BLOCK_ROWS)   # near-even split: minimal
        block_rows = -(-rows // nblocks)        # last-block waste
        block_rows = -(-block_rows // pack) * pack
    num_blocks = -(-rows // block_rows)
    needs_mask = (rows % block_rows) != 0

    kernel = functools.partial(
        _lsgan_kernel, targets=tuple(float(t) for t in targets),
        block_rows=block_rows, rows=rows, needs_mask=needs_mask)

    in_bytes = sum(int(m.size) * m.dtype.itemsize for m in mats)
    cost = pl.CostEstimate(flops=3 * len(mats) * n, transcendentals=0,
                           bytes_accessed=in_bytes + num_blocks * _LANE * 4)

    partials = pl.pallas_call(
        kernel,
        out_shape=jax.ShapeDtypeStruct((1, num_blocks * _LANE), jnp.float32),
        grid_spec=pltpu.PrefetchScalarGridSpec(
            num_scalar_prefetch=0,
            grid=(num_blocks,),
            in_specs=[pl.BlockSpec((block_rows, _LANE), lambda i: (i, 0))
                      for _ in mats],
            out_specs=pl.BlockSpec((1, _LANE), lambda i: (0, i)),
        ),
        compiler_params=pltpu.CompilerParams(
            dimension_semantics=("parallel",)),
        cost_estimate=cost,
    )(*mats)

    # Tiny finalize outside the kernel: keeps the grid axis "parallel"
    # (megacore sharding on v7x) with no carried accumulator state.
    return jnp.sum(partials) * jnp.float32(1.0 / n)


def lsgan_loss(d_real, d_fake, dis_or_gen=True):
    """Pallas implementation of LSGANLoss.forward."""
    if dis_or_gen:
        if int(d_real.size) == int(d_fake.size):
            # Fused: mean((real-1)^2) + mean(fake^2) = (sse_real + sse_fake)/n
            return _lsgan_mean([d_real, d_fake], [1.0, 0.0])
        # Fallback for mismatched element counts (not the usual case).
        return _lsgan_mean([d_real], [1.0]) + _lsgan_mean([d_fake], [0.0])
    return _lsgan_mean([d_fake], [1.0])   # generator: fake vs ones


if __name__ == "__main__":
    key = jax.random.PRNGKey(0)
    k1, k2, k3, k4, k5, k6 = jax.random.split(key, 6)

    # Typical (small) patch-discriminator outputs, NCHW.
    d_real = jax.random.normal(k1, (2, 1, 16, 16), dtype=jnp.float32)
    d_fake = jax.random.normal(k2, (2, 1, 16, 16), dtype=jnp.float32)

    loss_d = jax.block_until_ready(lsgan_loss(d_real, d_fake, dis_or_gen=True))
    loss_g = jax.block_until_ready(lsgan_loss(d_real, d_fake, dis_or_gen=False))

    ref_d = jnp.mean((d_real - 1.0) ** 2) + jnp.mean(d_fake ** 2)
    ref_g = jnp.mean((d_fake - 1.0) ** 2)
    assert jnp.allclose(loss_d, ref_d, rtol=1e-5, atol=1e-5), (loss_d, ref_d)
    assert jnp.allclose(loss_g, ref_g, rtol=1e-5, atol=1e-5), (loss_g, ref_g)

    # Non-128-divisible element count -> exercises the target-value lane pad.
    a = jax.random.normal(k3, (2, 3, 10, 10), dtype=jnp.float32)
    b = jax.random.normal(k4, (2, 3, 10, 10), dtype=jnp.float32)
    got = jax.block_until_ready(lsgan_loss(a, b, dis_or_gen=True))
    ref = jnp.mean((a - 1.0) ** 2) + jnp.mean(b ** 2)
    assert jnp.allclose(got, ref, rtol=1e-5, atol=1e-5), (got, ref)

    # Larger input -> multi-block "parallel" grid with a masked partial
    # last block (rows=4219, two blocks of 2112).
    c = jax.random.normal(k5, (2, 3, 300, 300), dtype=jnp.float32)
    d = jax.random.normal(k6, (2, 3, 300, 300), dtype=jnp.float32)
    got2 = jax.block_until_ready(lsgan_loss(c, d, dis_or_gen=True))
    ref2 = jnp.mean((c - 1.0) ** 2) + jnp.mean(d ** 2)
    assert jnp.allclose(got2, ref2, rtol=1e-5, atol=1e-5), (got2, ref2)

    print("KERNEL_OK")
</pallas_src>

<mosaic_0001>
module attributes {stable_mosaic.version = 11 : i64} {
  func.func @_lsgan_kernel(%arg0: i32, %arg1: memref<4x128xf32, #tpu.memory_space<vmem>>, %arg2: memref<4x128xf32, #tpu.memory_space<vmem>>, %arg3: memref<1x128xf32, #tpu.memory_space<vmem>>) attributes {dimension_semantics = [#tpu.dimension_semantics<parallel>], iteration_bounds = array<i64: 1>, scalar_prefetch = 0 : i64, scratch_operands = 0 : i64, tpu.core_type = #tpu.core_type<tc>, window_params = [{transform_indices = @transform_0, window_bounds = array<i64: 4, 128>}, {transform_indices = @transform_1, window_bounds = array<i64: 4, 128>}, {transform_indices = @transform_2, window_bounds = array<i64: 1, 128>}]} {
    %cst = arith.constant 0.000000e+00 : f32
    %0 = vector.broadcast %cst : f32 to vector<1x128xf32>
    %c0 = arith.constant 0 : index
    %c0_0 = arith.constant 0 : index
    %1 = vector.load %arg1[%c0, %c0_0] : memref<4x128xf32, #tpu.memory_space<vmem>>, vector<4x128xf32>
    %cst_1 = arith.constant 1.000000e+00 : f32
    %2 = vector.broadcast %cst_1 : f32 to vector<4x128xf32>
    %3 = arith.subf %1, %2 : vector<4x128xf32>
    %4 = arith.mulf %3, %3 : vector<4x128xf32>
    %cst_2 = arith.constant dense<0.000000e+00> : vector<128xf32>
    %5 = vector.multi_reduction <add>, %4, %cst_2 [0] : vector<4x128xf32> to vector<128xf32>
    %6 = vector.shape_cast %5 : vector<128xf32> to vector<1x128xf32>
    %7 = arith.addf %0, %6 : vector<1x128xf32>
    %c0_3 = arith.constant 0 : index
    %c0_4 = arith.constant 0 : index
    %8 = vector.load %arg2[%c0_3, %c0_4] : memref<4x128xf32, #tpu.memory_space<vmem>>, vector<4x128xf32>
    %cst_5 = arith.constant 0.000000e+00 : f32
    %9 = vector.broadcast %cst_5 : f32 to vector<4x128xf32>
    %10 = arith.subf %8, %9 : vector<4x128xf32>
    %11 = arith.mulf %10, %10 : vector<4x128xf32>
    %cst_6 = arith.constant dense<0.000000e+00> : vector<128xf32>
    %12 = vector.multi_reduction <add>, %11, %cst_6 [0] : vector<4x128xf32> to vector<128xf32>
    %13 = vector.shape_cast %12 : vector<128xf32> to vector<1x128xf32>
    %14 = arith.addf %7, %13 : vector<1x128xf32>
    %c0_7 = arith.constant 0 : index
    %c0_8 = arith.constant 0 : index
    %15 = vector.load %arg3[%c0_7, %c0_8] : memref<1x128xf32, #tpu.memory_space<vmem>>, vector<1x128xf32>
    tpu.vector_store %arg3[%c0_7, %c0_8], %14 {strides = array<i32>} : memref<1x128xf32, #tpu.memory_space<vmem>>, vector<1x128xf32>,
    return
  }
  func.func @transform_0(%arg0: i32) -> (i32, i32) {
    %c0_i32 = arith.constant 0 : i32
    %c0_i32_0 = arith.constant 0 : i32
    return %arg0, %c0_i32 : i32, i32
  }
  func.func @transform_1(%arg0: i32) -> (i32, i32) {
    %c0_i32 = arith.constant 0 : i32
    %c0_i32_0 = arith.constant 0 : i32
    return %arg0, %c0_i32 : i32, i32
  }
  func.func @transform_2(%arg0: i32) -> (i32, i32) {
    %c0_i32 = arith.constant 0 : i32
    %c0_i32_0 = arith.constant 0 : i32
    return %c0_i32, %arg0 : i32, i32
  }
}

</mosaic_0001>

<llo_original>
// kernel: tpu_custom_call.1
$region0: #{tpu_custom_call.1}
  #allocation0 [shape = 'u32[]', space=smem, size = 0x4, offset = 0x4, fixed_abs, tag = 'smem constant byte address 0x4 - core index']
  #allocation1 [shape = 'u32[72,128]{1,0:T(1,128)}', space=vmem, size = 0x9000, scoped, tag = 'internal scratch']
  %s0 = inlined_call_operand.hbm [shape: f32[4,128], index: 0, kind: input, shape index: {}]
  %s1 = inlined_call_operand.hbm [shape: f32[4,128], index: 1, kind: input, shape index: {}]
  %s2 = inlined_call_operand.hbm [shape: f32[1,128], index: 2, kind: output, shape index: {}]
  %s3 = sld [smem:[#allocation0]]
  $region26: #{tpu_custom_call.1} parent=0
    _
  %s5 = ssub.s32 1, %s3
  %s6 = scalar_select 0, %s5, %s3
  $region1: #{tpu_custom_call.1} parent=0
    #allocation2 [shape = 'u8[2048]{0}', space=vmem, size = 0x800, scoped, tag = 'input window, operand 0, single buffered']
    #allocation3 [shape = 's32[1]{0}', space=sflag, size = 0x4, scoped, tag = 'scoped memory for tpu_custom_call.1']
    #allocation4 [shape = 's32[1]{0}', space=sflag, size = 0x4, scoped, tag = 'scoped memory for tpu_custom_call.1']
    #allocation5 [shape = 'u8[2048]{0}', space=vmem, size = 0x800, scoped, tag = 'input window, operand 1, single buffered']
    #allocation6 [shape = 's32[1]{0}', space=sflag, size = 0x4, scoped, tag = 'scoped memory for tpu_custom_call.1']
    #allocation7 [shape = 'u8[512]{0}', space=vmem, size = 0x400, scoped, tag = 'output window, operand 0, single buffered']
    %7 = vsyncpa [#allocation3], 0
    %8 = vsyncpa [#allocation6], 0
    %9 = vsyncpa [#allocation4], 0
    // Predicated region
    $region2: #{tpu_custom_call.1} parent=1 // pred_check
      _
    $region3: #{tpu_custom_call.1} parent=1 // pred_check_branch
      %11 = sbr.rel (0) target = $region5
    $region4: #{tpu_custom_call.1} parent=1 // pred_region
      %13 = vsyncadd [#allocation3], 0
      %s15 = sshll.u32 %s0, 4
      %s16 = int_to_ptr.hbm [resolvable:$true] %s15
      %s17 = sshll.u32 [#allocation2], 4
      %s18 = int_to_ptr.vmem [resolvable:$true] %s17
      %20 = dma.hbm_to_vmem [thread:$0]  %s16, 64, %s18, [#allocation3]
    $region5: #{tpu_custom_call.1} parent=1 // pred_fallthru
      _
    // Predicated region
    $region6: #{tpu_custom_call.1} parent=1 // pred_check
      _
    $region7: #{tpu_custom_call.1} parent=1 // pred_check_branch
      %22 = sbr.rel (0) target = $region9
    $region8: #{tpu_custom_call.1} parent=1 // pred_region
      %24 = vsyncadd [#allocation6], 0
      %s26 = sshll.u32 %s1, 4
      %s27 = int_to_ptr.hbm [resolvable:$true] %s26
      %s28 = sshll.u32 [#allocation5], 4
      %s29 = int_to_ptr.vmem [resolvable:$true] %s28
      %31 = dma.hbm_to_vmem [thread:$0]  %s27, 64, %s29, [#allocation6]
    $region9: #{tpu_custom_call.1} parent=1 // pred_fallthru
      _
    // Predicated region
    $region10: #{tpu_custom_call.1} parent=1 // pred_check
      _
    $region11: #{tpu_custom_call.1} parent=1 // pred_check_branch
      %33 = sbr.rel (0) target = $region13
    $region12: #{tpu_custom_call.1} parent=1 // pred_region
      %35 = dma.done [#allocation3], 64
    $region13: #{tpu_custom_call.1} parent=1 // pred_fallthru
      _
    // Predicated region
    $region14: #{tpu_custom_call.1} parent=1 // pred_check
      _
    $region15: #{tpu_custom_call.1} parent=1 // pred_check_branch
      %37 = sbr.rel (0) target = $region17
    $region16: #{tpu_custom_call.1} parent=1 // pred_region
      %39 = dma.done [#allocation6], 64
    $region17: #{tpu_custom_call.1} parent=1 // pred_fallthru
      _
    %v40 = vld [vmem:[#allocation2] sm:$0xf]
    %v41 = vsub.f32 %v40, 1.0
    %v42 = vmul.f32 %v41, %v41
    %vm43 = vcmask 1043456
    %v44 = vsel %vm43, %v42, 0.0
    %v45 = vrot.slane %v44, 4
    %v46 = vadd.f32 %v44, %v45
    %v47 = vrot.slane %v46, 2
    %v48 = vadd.f32 %v46, %v47
    %v49 = vrot.slane %v48, 1
    %v50 = vadd.f32 %v48, %v49
    %v51 = vadd.f32 %v50, 0.0
    %v52 = vld [vmem:[#allocation5] sm:$0xf]
    %v53 = vmul.f32 %v52, %v52
    %v54 = vsel %vm43, %v53, 0.0
    %v55 = vrot.slane %v54, 4
    %v56 = vadd.f32 %v54, %v55
    %v57 = vrot.slane %v56, 2
    %v58 = vadd.f32 %v56, %v57
    %v59 = vrot.slane %v58, 1
    %v60 = vadd.f32 %v58, %v59
    %v61 = vadd.f32 %v51, %v60
    %62 = vst [vmem:[#allocation7] sm:$0x1] %v61
    // Predicated region
    $region18: #{tpu_custom_call.1} parent=1 // pred_check
      _
    $region19: #{tpu_custom_call.1} parent=1 // pred_check_branch
      %64 = sbr.rel (0) target = $region21
    $region20: #{tpu_custom_call.1} parent=1 // pred_region
      %66 = vsyncadd [#allocation4], 0
      %s68 = sshll.u32 [#allocation7], 4
      %s69 = int_to_ptr.vmem [resolvable:$true] %s68
      %s70 = sshll.u32 %s2, 4
      %s71 = int_to_ptr.hbm [resolvable:$true] %s70
      %73 = dma.vmem_to_hbm [thread:$0]  %s69, 16, %s71, [#allocation4]
    $region21: #{tpu_custom_call.1} parent=1 // pred_fallthru
      _
    // Predicated region
    $region22: #{tpu_custom_call.1} parent=1 // pred_check
      _
    $region23: #{tpu_custom_call.1} parent=1 // pred_check_branch
      %75 = sbr.rel (0) target = $region25
    $region24: #{tpu_custom_call.1} parent=1 // pred_region
      %77 = dma.done [#allocation4], 16
    $region25: #{tpu_custom_call.1} parent=1 // pred_fallthru
      _
    %78 = vsyncpa [#allocation3], 1
    %79 = vsyncpa [#allocation6], 1
    %80 = vsyncpa [#allocation4], 1

</llo_original>
